<compile_context>
chip_gen: v6e
topology: v6e:2x2x1
jax: 0.10.0
libtpu: 0.0.40
codegen_flags: <defaults>
</compile_context>

<pallas_src>
from functools import partial
import math

import jax
import jax.numpy as jnp
from jax import lax
from jax.experimental import pallas as pl
from jax.experimental.pallas import tpu as pltpu

LANE = 128
_E_MINUS_1 = math.e - 1.0
_UNROLL_CLASS_LIMIT = 32


def _round_up(a, b):
    return -(-a // b) * b


def _kl_kernel(scale, logzp, x_ref, t_ref, o_ref, acc_ref, *ex_scratch):
    B, C, R, L = x_ref.shape
    tile = pl.program_id(1)

    @pl.when(tile == 0)
    def _init():
        acc_ref[...] = jnp.zeros_like(acc_ref)

    t = t_ref[...]                                   # (B, R, L) float labels

    def per_class(s_c, t_c):
        # s_c: class-c softmax probs, (B, R, L), values in (0, 1] -> no max
        # shift needed for the batch-axis softmax. t_c: 0/1 one-hot slice.
        es = jnp.exp(s_c)                                        # (B, R, L)
        ses = jnp.sum(es, axis=0)                                # (R, L)
        # sum_b q_b*(log q_b - log p_b)
        #   = (1/ses) * sum_b es_b*(s_c_b - t_c_b) - log(ses) + log(Zp)
        # using sum_b q_b == 1 and Zp = cnt*(e-1) + B (cnt = #ones, integer).
        wsum = jnp.sum(es * (s_c - t_c), axis=0) * (1.0 / ses)   # (R, L)
        cnt = jnp.sum(t_c, axis=0)                               # (R, L)
        log_zp = jnp.full_like(cnt, jnp.float32(logzp[0]))
        for k in range(1, B + 1):                                # VALU-only select
            log_zp = jnp.where(cnt > (k - 0.5), jnp.float32(logzp[k]), log_zp)
        return wsum - jnp.log(ses) + log_zp                      # (R, L)

    if C <= _UNROLL_CLASS_LIMIT:
        x = x_ref[...]                                           # (B, C, R, L)
        m = jnp.max(x, axis=1, keepdims=True)                    # (B, 1, R, L)
        ex = jnp.exp(x - m)                                      # (B, C, R, L)
        inv_se = 1.0 / jnp.sum(ex, axis=1, keepdims=True)        # (B, 1, R, L)
        tile_acc = jnp.zeros((R, L), jnp.float32)
        for c in range(C):
            s_c = ex[:, c] * inv_se[:, 0]
            t_c = (t == jnp.float32(c)).astype(jnp.float32)
            tile_acc = tile_acc + per_class(s_c, t_c)
    else:
        # Large-C streaming path: bound per-iteration temporaries to (B,R,L)
        # and cache exp(x - m) in VMEM so it is computed exactly once.
        ex_ref = ex_scratch[0]                                   # (B, C, R, L)

        def max_body(c, m_acc):
            return jnp.maximum(m_acc, x_ref[:, c])
        m = lax.fori_loop(1, C, max_body, x_ref[:, 0], unroll=4)  # (B, R, L)

        def sum_body(c, se_acc):
            e = jnp.exp(x_ref[:, c] - m)
            ex_ref[:, c] = e
            return se_acc + e
        inv_se = 1.0 / lax.fori_loop(0, C, sum_body, jnp.zeros_like(m), unroll=4)

        def cls_body(c, acc):
            s_c = ex_ref[:, c] * inv_se
            t_c = (t == c.astype(jnp.float32)).astype(jnp.float32)
            return acc + per_class(s_c, t_c)
        tile_acc = lax.fori_loop(0, C, cls_body,
                                 jnp.zeros((R, L), jnp.float32), unroll=4)

    acc_ref[...] += tile_acc

    @pl.when(tile == pl.num_programs(1) - 1)
    def _finalize():
        row = jnp.sum(acc_ref[...], axis=0, keepdims=True) * jnp.float32(scale)
        o_ref[...] = row.reshape(1, 1, L)


def _chip_info():
    """Best-effort chip detection: (has_two_tensorcores, physical_vmem_bytes)."""
    kind = ""
    try:
        kind = jax.devices()[0].device_kind.lower()
    except Exception:
        pass
    is_v7 = ("v7" in kind) or ("7x" in kind)
    single_tc = ("lite" in kind) or ("v5e" in kind) or ("v6" in kind)
    two_tc = is_v7 or ((("v4" in kind) or ("v5" in kind)) and not single_tc)
    vmem_phys = (64 if is_v7 else 128) * 1024 * 1024
    return two_tc, vmem_phys


def _pick_tiling(B, C, n_rows, two_tc, vmem_phys):
    """Returns (P, R, T, vmem_limit_bytes)."""
    # Working-set bytes per row-of-128 (f32): double-buffered x block (2C) +
    # in-kernel temporaries / exp cache (~3C) + t block x2 + misc.
    per_row = (5 * C + 8) * B * LANE * 4
    headroom = 8 * 1024 * 1024
    small_vmem = vmem_phys <= 64 * 1024 * 1024             # v7x: 64 MiB per TC
    budget = (32 if small_vmem else 64) * 1024 * 1024      # target working set
    hard_cap = vmem_phys - 2 * headroom

    def limit_for(rows):
        need = rows * per_row + headroom
        return int(min(max(need, 32 * 1024 * 1024), vmem_phys - headroom))

    if n_rows < 16 and n_rows * per_row <= hard_cap:
        return 1, n_rows, 1, limit_for(n_rows)              # one full-extent block

    if 8 * per_row > hard_cap:
        # TODO(synk): block the class axis (two-pass online class softmax) so
        #             huge B*C fits; currently unsupported.
        raise ValueError("KL Pallas kernel: an 8-row tile of the (B, C) block "
                         "does not fit in VMEM for this shape.")

    budget_rows = (budget // per_row) // 8 * 8
    hard_rows = (hard_cap // per_row) // 8 * 8
    max_rows = max(8, min(1024, budget_rows, hard_rows))

    P = 2 if (two_tc and n_rows >= 16) else 1               # v7x: feed both TCs
    R = min(max_rows, _round_up(-(-n_rows // P), 8))
    T = -(-n_rows // (P * R))
    return P, R, T, limit_for(R)


def kl_loss(inputs, target, n_classes):
    """inputs: (B, C, H, W) f32 logits; target: (B, 1, H, W) integer-valued labels."""
    B, C, H, W = inputs.shape
    assert C == n_classes
    N = H * W
    n_rows = -(-N // LANE)
    two_tc, vmem_phys = _chip_info()
    P, R, T, vmem_limit = _pick_tiling(B, C, n_rows, two_tc, vmem_phys)
    n_rows_pad = P * T * R
    N_pad = n_rows_pad * LANE

    # Keep the natural NCHW layout: contiguous (free) reshape, no HBM transpose.
    x = inputs.reshape(B, C, N).astype(jnp.float32)
    t = target.reshape(B, N).astype(jnp.float32)
    if N_pad != N:
        # Zero padding contributes (exactly, up to fp eps) 0 to the loss:
        # both batch softmaxes are uniform at padded positions.
        x = jnp.pad(x, ((0, 0), (0, 0), (0, N_pad - N)))
        t = jnp.pad(t, ((0, 0), (0, N_pad - N)))
    x = x.reshape(B, C, n_rows_pad, LANE)
    t = t.reshape(B, n_rows_pad, LANE)

    scale = 1.0 / float(B * N * C)   # mean over (B, H, W) per class, / n_classes
    # log(Zp) table for the one-hot batch softmax denominator, Zp = k*(e-1)+B.
    logzp = tuple(float(math.log(k * _E_MINUS_1 + B)) for k in range(B + 1))

    scratch = [pltpu.VMEM((R, LANE), jnp.float32)]
    if C > _UNROLL_CLASS_LIMIT:
        scratch.append(pltpu.VMEM((B, C, R, LANE), jnp.float32))  # exp cache

    out = pl.pallas_call(
        partial(_kl_kernel, scale, logzp),
        out_shape=jax.ShapeDtypeStruct((P, 1, LANE), jnp.float32),
        grid_spec=pltpu.PrefetchScalarGridSpec(
            num_scalar_prefetch=0,
            grid=(P, T),
            in_specs=[
                pl.BlockSpec((B, C, R, LANE), lambda p, i: (0, 0, p * T + i, 0)),
                pl.BlockSpec((B, R, LANE), lambda p, i: (0, p * T + i, 0)),
            ],
            out_specs=pl.BlockSpec((1, 1, LANE), lambda p, i: (p, 0, 0)),
            scratch_shapes=scratch,
        ),
        compiler_params=pltpu.CompilerParams(
            dimension_semantics=("parallel", "arbitrary"),
            vmem_limit_bytes=vmem_limit,
        ),
    )(x, t)
    return jnp.sum(out)


def _kl_loss_ref(inputs, target, n_classes):
    """Pure-JAX reference mirroring the PyTorch forward."""
    p = jax.nn.softmax(inputs, axis=1)                      # (B, C, H, W)
    loss = jnp.float32(0.0)
    for c in range(n_classes):
        s_c = p[:, c]                                       # (B, H, W)
        t_c = (target[:, 0] == c).astype(jnp.float32)       # (B, H, W)
        q = jax.nn.softmax(s_c, axis=0)
        log_q = jax.nn.log_softmax(s_c, axis=0)
        log_p = jax.nn.log_softmax(t_c, axis=0)
        loss = loss + jnp.mean(q * (log_q - log_p))
    return loss / n_classes


if __name__ == "__main__":
    key = jax.random.PRNGKey(0)

    # Main check: small shape from the module spec (unrolled class path).
    B, C, H, W = 2, 4, 16, 16
    k1, k2, k3, k4 = jax.random.split(key, 4)
    inputs = jax.random.normal(k1, (B, C, H, W), dtype=jnp.float32)
    target = jax.random.randint(k2, (B, 1, H, W), 0, C).astype(jnp.float32)
    loss = jax.block_until_ready(kl_loss(inputs, target, C))
    ref = _kl_loss_ref(inputs, target, C)
    assert jnp.allclose(loss, ref, atol=1e-5, rtol=1e-5), (loss, ref)

    # Second check: large class count -> streaming path with exp cache, plus
    # pixel padding (H*W not a multiple of 128).
    B2, C2, H2, W2 = 2, 40, 8, 8
    inputs2 = jax.random.normal(k3, (B2, C2, H2, W2), dtype=jnp.float32)
    target2 = jax.random.randint(k4, (B2, 1, H2, W2), 0, C2).astype(jnp.float32)
    loss2 = jax.block_until_ready(kl_loss(inputs2, target2, C2))
    ref2 = _kl_loss_ref(inputs2, target2, C2)
    assert jnp.allclose(loss2, ref2, atol=1e-5, rtol=1e-5), (loss2, ref2)

    print("KERNEL_OK")
</pallas_src>

<mosaic_0001>
module attributes {stable_mosaic.version = 11 : i64} {
  func.func @_kl_kernel(%arg0: i32, %arg1: i32, %arg2: memref<2x4x2x128xf32, #tpu.memory_space<vmem>>, %arg3: memref<2x2x128xf32, #tpu.memory_space<vmem>>, %arg4: memref<1x1x128xf32, #tpu.memory_space<vmem>>, %arg5: memref<2x128xf32, #tpu.memory_space<vmem>>) attributes {dimension_semantics = [#tpu.dimension_semantics<parallel>, #tpu.dimension_semantics<arbitrary>], iteration_bounds = array<i64: 1, 1>, scalar_prefetch = 0 : i64, scratch_operands = 1 : i64, tpu.core_type = #tpu.core_type<tc>, window_params = [{transform_indices = @transform_0, window_bounds = array<i64: 2, 4, 2, 128>}, {transform_indices = @transform_1, window_bounds = array<i64: 2, 2, 128>}, {transform_indices = @transform_2, window_bounds = array<i64: 1, 1, 128>}]} {
    %c0_i32 = arith.constant 0 : i32
    %0 = arith.cmpi eq, %arg1, %c0_i32 : i32
    %1 = arith.extui %0 : i1 to i32
    %c0_i32_0 = arith.constant 0 : i32
    %2 = arith.cmpi ne, %1, %c0_i32_0 : i32
    scf.if %2 {
      %cst_56 = arith.constant 0.000000e+00 : f32
      %141 = vector.broadcast %cst_56 : f32 to vector<2x128xf32>
      %c0_57 = arith.constant 0 : index
      %c0_58 = arith.constant 0 : index
      %142 = vector.load %arg5[%c0_57, %c0_58] : memref<2x128xf32, #tpu.memory_space<vmem>>, vector<2x128xf32>
      tpu.vector_store %arg5[%c0_57, %c0_58], %141 {strides = array<i32>} : memref<2x128xf32, #tpu.memory_space<vmem>>, vector<2x128xf32>,
    } else {
    }
    %c0 = arith.constant 0 : index
    %c0_1 = arith.constant 0 : index
    %c0_2 = arith.constant 0 : index
    %3 = vector.load %arg3[%c0, %c0_1, %c0_2] : memref<2x2x128xf32, #tpu.memory_space<vmem>>, vector<2x2x128xf32>
    %c0_3 = arith.constant 0 : index
    %c0_4 = arith.constant 0 : index
    %c0_5 = arith.constant 0 : index
    %c0_6 = arith.constant 0 : index
    %4 = vector.load %arg2[%c0_3, %c0_4, %c0_5, %c0_6] : memref<2x4x2x128xf32, #tpu.memory_space<vmem>>, vector<2x4x2x128xf32>
    %cst = arith.constant dense<0xFF800000> : vector<2x2x128xf32>
    %5 = vector.multi_reduction <maximumf>, %4, %cst [1] : vector<2x4x2x128xf32> to vector<2x2x128xf32>
    %6 = vector.shape_cast %5 : vector<2x2x128xf32> to vector<2x1x2x128xf32>
    %7 = vector.broadcast %6 : vector<2x1x2x128xf32> to vector<2x4x2x128xf32>
    %8 = arith.subf %4, %7 : vector<2x4x2x128xf32>
    %9 = math.exp %8 : vector<2x4x2x128xf32>
    %cst_7 = arith.constant dense<0.000000e+00> : vector<2x2x128xf32>
    %10 = vector.multi_reduction <add>, %9, %cst_7 [1] : vector<2x4x2x128xf32> to vector<2x2x128xf32>
    %11 = vector.shape_cast %10 : vector<2x2x128xf32> to vector<2x1x2x128xf32>
    %cst_8 = arith.constant 1.000000e+00 : f32
    %12 = vector.broadcast %cst_8 : f32 to vector<2x1x2x128xf32>
    %13 = arith.divf %12, %11 : vector<2x1x2x128xf32>
    %cst_9 = arith.constant 0.000000e+00 : f32
    %14 = vector.broadcast %cst_9 : f32 to vector<2x128xf32>
    %15 = vector.extract_strided_slice %9 {offsets = [0, 0, 0, 0], sizes = [2, 1, 2, 128], strides = [1, 1, 1, 1]} : vector<2x4x2x128xf32> to vector<2x1x2x128xf32>
    %16 = vector.shape_cast %15 : vector<2x1x2x128xf32> to vector<2x2x128xf32>
    %17 = vector.shape_cast %13 : vector<2x1x2x128xf32> to vector<2x2x128xf32>
    %18 = arith.mulf %16, %17 : vector<2x2x128xf32>
    %cst_10 = arith.constant 0.000000e+00 : f32
    %19 = vector.broadcast %cst_10 : f32 to vector<2x2x128xf32>
    %20 = arith.cmpf oeq, %3, %19 : vector<2x2x128xf32>
    %21 = arith.extui %20 : vector<2x2x128xi1> to vector<2x2x128xi32>
    %22 = arith.sitofp %21 : vector<2x2x128xi32> to vector<2x2x128xf32>
    %23 = math.exp %18 : vector<2x2x128xf32>
    %cst_11 = arith.constant dense<0.000000e+00> : vector<2x128xf32>
    %24 = vector.multi_reduction <add>, %23, %cst_11 [0] : vector<2x2x128xf32> to vector<2x128xf32>
    %25 = arith.subf %18, %22 : vector<2x2x128xf32>
    %26 = arith.mulf %23, %25 : vector<2x2x128xf32>
    %cst_12 = arith.constant dense<0.000000e+00> : vector<2x128xf32>
    %27 = vector.multi_reduction <add>, %26, %cst_12 [0] : vector<2x2x128xf32> to vector<2x128xf32>
    %cst_13 = arith.constant 1.000000e+00 : f32
    %28 = vector.broadcast %cst_13 : f32 to vector<2x128xf32>
    %29 = arith.divf %28, %24 : vector<2x128xf32>
    %30 = arith.mulf %27, %29 : vector<2x128xf32>
    %cst_14 = arith.constant dense<0.000000e+00> : vector<2x128xf32>
    %31 = vector.multi_reduction <add>, %22, %cst_14 [0] : vector<2x2x128xf32> to vector<2x128xf32>
    %cst_15 = arith.constant 0.693147182 : f32
    %32 = vector.broadcast %cst_15 : f32 to vector<2x128xf32>
    %cst_16 = arith.constant 5.000000e-01 : f32
    %33 = vector.broadcast %cst_16 : f32 to vector<2x128xf32>
    %34 = arith.cmpf ogt, %31, %33 : vector<2x128xf32>
    %cst_17 = arith.constant 1.31326163 : f32
    %35 = vector.broadcast %cst_17 : f32 to vector<2x128xf32>
    %36 = arith.select %34, %35, %32 : vector<2x128xi1>, vector<2x128xf32>
    %cst_18 = arith.constant 1.500000e+00 : f32
    %37 = vector.broadcast %cst_18 : f32 to vector<2x128xf32>
    %38 = arith.cmpf ogt, %31, %37 : vector<2x128xf32>
    %cst_19 = arith.constant 1.69314718 : f32
    %39 = vector.broadcast %cst_19 : f32 to vector<2x128xf32>
    %40 = arith.select %38, %39, %36 : vector<2x128xi1>, vector<2x128xf32>
    %41 = math.log %24 : vector<2x128xf32>
    %42 = arith.subf %30, %41 : vector<2x128xf32>
    %43 = arith.addf %42, %40 : vector<2x128xf32>
    %44 = arith.addf %14, %43 : vector<2x128xf32>
    %45 = vector.extract_strided_slice %9 {offsets = [0, 1, 0, 0], sizes = [2, 1, 2, 128], strides = [1, 1, 1, 1]} : vector<2x4x2x128xf32> to vector<2x1x2x128xf32>
    %46 = vector.shape_cast %45 : vector<2x1x2x128xf32> to vector<2x2x128xf32>
    %47 = vector.shape_cast %13 : vector<2x1x2x128xf32> to vector<2x2x128xf32>
    %48 = arith.mulf %46, %47 : vector<2x2x128xf32>
    %cst_20 = arith.constant 1.000000e+00 : f32
    %49 = vector.broadcast %cst_20 : f32 to vector<2x2x128xf32>
    %50 = arith.cmpf oeq, %3, %49 : vector<2x2x128xf32>
    %51 = arith.extui %50 : vector<2x2x128xi1> to vector<2x2x128xi32>
    %52 = arith.sitofp %51 : vector<2x2x128xi32> to vector<2x2x128xf32>
    %53 = math.exp %48 : vector<2x2x128xf32>
    %cst_21 = arith.constant dense<0.000000e+00> : vector<2x128xf32>
    %54 = vector.multi_reduction <add>, %53, %cst_21 [0] : vector<2x2x128xf32> to vector<2x128xf32>
    %55 = arith.subf %48, %52 : vector<2x2x128xf32>
    %56 = arith.mulf %53, %55 : vector<2x2x128xf32>
    %cst_22 = arith.constant dense<0.000000e+00> : vector<2x128xf32>
    %57 = vector.multi_reduction <add>, %56, %cst_22 [0] : vector<2x2x128xf32> to vector<2x128xf32>
    %cst_23 = arith.constant 1.000000e+00 : f32
    %58 = vector.broadcast %cst_23 : f32 to vector<2x128xf32>
    %59 = arith.divf %58, %54 : vector<2x128xf32>
    %60 = arith.mulf %57, %59 : vector<2x128xf32>
    %cst_24 = arith.constant dense<0.000000e+00> : vector<2x128xf32>
    %61 = vector.multi_reduction <add>, %52, %cst_24 [0] : vector<2x2x128xf32> to vector<2x128xf32>
    %cst_25 = arith.constant 0.693147182 : f32
    %62 = vector.broadcast %cst_25 : f32 to vector<2x128xf32>
    %cst_26 = arith.constant 5.000000e-01 : f32
    %63 = vector.broadcast %cst_26 : f32 to vector<2x128xf32>
    %64 = arith.cmpf ogt, %61, %63 : vector<2x128xf32>
    %cst_27 = arith.constant 1.31326163 : f32
    %65 = vector.broadcast %cst_27 : f32 to vector<2x128xf32>
    %66 = arith.select %64, %65, %62 : vector<2x128xi1>, vector<2x128xf32>
    %cst_28 = arith.constant 1.500000e+00 : f32
    %67 = vector.broadcast %cst_28 : f32 to vector<2x128xf32>
    %68 = arith.cmpf ogt, %61, %67 : vector<2x128xf32>
    %cst_29 = arith.constant 1.69314718 : f32
    %69 = vector.broadcast %cst_29 : f32 to vector<2x128xf32>
    %70 = arith.select %68, %69, %66 : vector<2x128xi1>, vector<2x128xf32>
    %71 = math.log %54 : vector<2x128xf32>
    %72 = arith.subf %60, %71 : vector<2x128xf32>
    %73 = arith.addf %72, %70 : vector<2x128xf32>
    %74 = arith.addf %44, %73 : vector<2x128xf32>
    %75 = vector.extract_strided_slice %9 {offsets = [0, 2, 0, 0], sizes = [2, 1, 2, 128], strides = [1, 1, 1, 1]} : vector<2x4x2x128xf32> to vector<2x1x2x128xf32>
    %76 = vector.shape_cast %75 : vector<2x1x2x128xf32> to vector<2x2x128xf32>
    %77 = vector.shape_cast %13 : vector<2x1x2x128xf32> to vector<2x2x128xf32>
    %78 = arith.mulf %76, %77 : vector<2x2x128xf32>
    %cst_30 = arith.constant 2.000000e+00 : f32
    %79 = vector.broadcast %cst_30 : f32 to vector<2x2x128xf32>
    %80 = arith.cmpf oeq, %3, %79 : vector<2x2x128xf32>
    %81 = arith.extui %80 : vector<2x2x128xi1> to vector<2x2x128xi32>
    %82 = arith.sitofp %81 : vector<2x2x128xi32> to vector<2x2x128xf32>
    %83 = math.exp %78 : vector<2x2x128xf32>
    %cst_31 = arith.constant dense<0.000000e+00> : vector<2x128xf32>
    %84 = vector.multi_reduction <add>, %83, %cst_31 [0] : vector<2x2x128xf32> to vector<2x128xf32>
    %85 = arith.subf %78, %82 : vector<2x2x128xf32>
    %86 = arith.mulf %83, %85 : vector<2x2x128xf32>
    %cst_32 = arith.constant dense<0.000000e+00> : vector<2x128xf32>
    %87 = vector.multi_reduction <add>, %86, %cst_32 [0] : vector<2x2x128xf32> to vector<2x128xf32>
    %cst_33 = arith.constant 1.000000e+00 : f32
    %88 = vector.broadcast %cst_33 : f32 to vector<2x128xf32>
    %89 = arith.divf %88, %84 : vector<2x128xf32>
    %90 = arith.mulf %87, %89 : vector<2x128xf32>
    %cst_34 = arith.constant dense<0.000000e+00> : vector<2x128xf32>
    %91 = vector.multi_reduction <add>, %82, %cst_34 [0] : vector<2x2x128xf32> to vector<2x128xf32>
    %cst_35 = arith.constant 0.693147182 : f32
    %92 = vector.broadcast %cst_35 : f32 to vector<2x128xf32>
    %cst_36 = arith.constant 5.000000e-01 : f32
    %93 = vector.broadcast %cst_36 : f32 to vector<2x128xf32>
    %94 = arith.cmpf ogt, %91, %93 : vector<2x128xf32>
    %cst_37 = arith.constant 1.31326163 : f32
    %95 = vector.broadcast %cst_37 : f32 to vector<2x128xf32>
    %96 = arith.select %94, %95, %92 : vector<2x128xi1>, vector<2x128xf32>
    %cst_38 = arith.constant 1.500000e+00 : f32
    %97 = vector.broadcast %cst_38 : f32 to vector<2x128xf32>
    %98 = arith.cmpf ogt, %91, %97 : vector<2x128xf32>
    %cst_39 = arith.constant 1.69314718 : f32
    %99 = vector.broadcast %cst_39 : f32 to vector<2x128xf32>
    %100 = arith.select %98, %99, %96 : vector<2x128xi1>, vector<2x128xf32>
    %101 = math.log %84 : vector<2x128xf32>
    %102 = arith.subf %90, %101 : vector<2x128xf32>
    %103 = arith.addf %102, %100 : vector<2x128xf32>
    %104 = arith.addf %74, %103 : vector<2x128xf32>
    %105 = vector.extract_strided_slice %9 {offsets = [0, 3, 0, 0], sizes = [2, 1, 2, 128], strides = [1, 1, 1, 1]} : vector<2x4x2x128xf32> to vector<2x1x2x128xf32>
    %106 = vector.shape_cast %105 : vector<2x1x2x128xf32> to vector<2x2x128xf32>
    %107 = vector.shape_cast %13 : vector<2x1x2x128xf32> to vector<2x2x128xf32>
    %108 = arith.mulf %106, %107 : vector<2x2x128xf32>
    %cst_40 = arith.constant 3.000000e+00 : f32
    %109 = vector.broadcast %cst_40 : f32 to vector<2x2x128xf32>
    %110 = arith.cmpf oeq, %3, %109 : vector<2x2x128xf32>
    %111 = arith.extui %110 : vector<2x2x128xi1> to vector<2x2x128xi32>
    %112 = arith.sitofp %111 : vector<2x2x128xi32> to vector<2x2x128xf32>
    %113 = math.exp %108 : vector<2x2x128xf32>
    %cst_41 = arith.constant dense<0.000000e+00> : vector<2x128xf32>
    %114 = vector.multi_reduction <add>, %113, %cst_41 [0] : vector<2x2x128xf32> to vector<2x128xf32>
    %115 = arith.subf %108, %112 : vector<2x2x128xf32>
    %116 = arith.mulf %113, %115 : vector<2x2x128xf32>
    %cst_42 = arith.constant dense<0.000000e+00> : vector<2x128xf32>
    %117 = vector.multi_reduction <add>, %116, %cst_42 [0] : vector<2x2x128xf32> to vector<2x128xf32>
    %cst_43 = arith.constant 1.000000e+00 : f32
    %118 = vector.broadcast %cst_43 : f32 to vector<2x128xf32>
    %119 = arith.divf %118, %114 : vector<2x128xf32>
    %120 = arith.mulf %117, %119 : vector<2x128xf32>
    %cst_44 = arith.constant dense<0.000000e+00> : vector<2x128xf32>
    %121 = vector.multi_reduction <add>, %112, %cst_44 [0] : vector<2x2x128xf32> to vector<2x128xf32>
    %cst_45 = arith.constant 0.693147182 : f32
    %122 = vector.broadcast %cst_45 : f32 to vector<2x128xf32>
    %cst_46 = arith.constant 5.000000e-01 : f32
    %123 = vector.broadcast %cst_46 : f32 to vector<2x128xf32>
    %124 = arith.cmpf ogt, %121, %123 : vector<2x128xf32>
    %cst_47 = arith.constant 1.31326163 : f32
    %125 = vector.broadcast %cst_47 : f32 to vector<2x128xf32>
    %126 = arith.select %124, %125, %122 : vector<2x128xi1>, vector<2x128xf32>
    %cst_48 = arith.constant 1.500000e+00 : f32
    %127 = vector.broadcast %cst_48 : f32 to vector<2x128xf32>
    %128 = arith.cmpf ogt, %121, %127 : vector<2x128xf32>
    %cst_49 = arith.constant 1.69314718 : f32
    %129 = vector.broadcast %cst_49 : f32 to vector<2x128xf32>
    %130 = arith.select %128, %129, %126 : vector<2x128xi1>, vector<2x128xf32>
    %131 = math.log %114 : vector<2x128xf32>
    %132 = arith.subf %120, %131 : vector<2x128xf32>
    %133 = arith.addf %132, %130 : vector<2x128xf32>
    %134 = arith.addf %104, %133 : vector<2x128xf32>
    %c0_50 = arith.constant 0 : index
    %c0_51 = arith.constant 0 : index
    %135 = vector.load %arg5[%c0_50, %c0_51] : memref<2x128xf32, #tpu.memory_space<vmem>>, vector<2x128xf32>
    %136 = arith.addf %135, %134 : vector<2x128xf32>
    %c0_52 = arith.constant 0 : index
    %c0_53 = arith.constant 0 : index
    %137 = vector.load %arg5[%c0_52, %c0_53] : memref<2x128xf32, #tpu.memory_space<vmem>>, vector<2x128xf32>
    tpu.vector_store %arg5[%c0_52, %c0_53], %136 {strides = array<i32>} : memref<2x128xf32, #tpu.memory_space<vmem>>, vector<2x128xf32>,
    %c0_i32_54 = arith.constant 0 : i32
    %138 = arith.cmpi eq, %arg1, %c0_i32_54 : i32
    %139 = arith.extui %138 : i1 to i32
    %c0_i32_55 = arith.constant 0 : i32
    %140 = arith.cmpi ne, %139, %c0_i32_55 : i32
    scf.if %140 {
      %c0_56 = arith.constant 0 : index
      %c0_57 = arith.constant 0 : index
      %141 = vector.load %arg5[%c0_56, %c0_57] : memref<2x128xf32, #tpu.memory_space<vmem>>, vector<2x128xf32>
      %cst_58 = arith.constant dense<0.000000e+00> : vector<128xf32>
      %142 = vector.multi_reduction <add>, %141, %cst_58 [0] : vector<2x128xf32> to vector<128xf32>
      %143 = vector.shape_cast %142 : vector<128xf32> to vector<1x128xf32>
      %cst_59 = arith.constant 4.8828125E-4 : f32
      %144 = vector.broadcast %cst_59 : f32 to vector<1x128xf32>
      %145 = arith.mulf %143, %144 : vector<1x128xf32>
      %146 = vector.shape_cast %145 : vector<1x128xf32> to vector<1x1x128xf32>
      %c0_60 = arith.constant 0 : index
      %c0_61 = arith.constant 0 : index
      %c0_62 = arith.constant 0 : index
      %147 = vector.load %arg4[%c0_60, %c0_61, %c0_62] : memref<1x1x128xf32, #tpu.memory_space<vmem>>, vector<1x1x128xf32>
      tpu.vector_store %arg4[%c0_60, %c0_61, %c0_62], %146 {strides = array<i32>} : memref<1x1x128xf32, #tpu.memory_space<vmem>>, vector<1x1x128xf32>,
    } else {
    }
    return
  }
  func.func @transform_0(%arg0: i32, %arg1: i32) -> (i32, i32, i32, i32) {
    %c1_i32 = arith.constant 1 : i32
    %0 = arith.muli %arg0, %c1_i32 : i32
    %1 = arith.addi %0, %arg1 : i32
    %c0_i32 = arith.constant 0 : i32
    %c0_i32_0 = arith.constant 0 : i32
    %c0_i32_1 = arith.constant 0 : i32
    %c0_i32_2 = arith.constant 0 : i32
    return %c0_i32, %c0_i32_0, %1, %c0_i32_1 : i32, i32, i32, i32
  }
  func.func @transform_1(%arg0: i32, %arg1: i32) -> (i32, i32, i32) {
    %c1_i32 = arith.constant 1 : i32
    %0 = arith.muli %arg0, %c1_i32 : i32
    %1 = arith.addi %0, %arg1 : i32
    %c0_i32 = arith.constant 0 : i32
    %c0_i32_0 = arith.constant 0 : i32
    %c0_i32_1 = arith.constant 0 : i32
    return %c0_i32, %1, %c0_i32_0 : i32, i32, i32
  }
  func.func @transform_2(%arg0: i32, %arg1: i32) -> (i32, i32, i32) {
    %c0_i32 = arith.constant 0 : i32
    %c0_i32_0 = arith.constant 0 : i32
    %c0_i32_1 = arith.constant 0 : i32
    return %arg0, %c0_i32, %c0_i32_0 : i32, i32, i32
  }
}

</mosaic_0001>

<llo_original>
// kernel: tpu_custom_call.1
$region0: #{tpu_custom_call.1}
  #allocation0 [shape = 'u32[]', space=smem, size = 0x4, offset = 0x4, fixed_abs, tag = 'smem constant byte address 0x4 - core index']
  #allocation1 [shape = 'u32[144,128]{1,0:T(1,128)}', space=vmem, size = 0x12000, scoped, tag = 'internal scratch']
  #allocation2 [shape = 'f32[2,128]{1,0:T(2,128)}', space=vmem, size = 0x400, scoped, tag = 'scratch operand']
  %s0 = inlined_call_operand.hbm [shape: f32[2,4,2,128], index: 0, kind: input, shape index: {}]
  %s1 = inlined_call_operand.hbm [shape: f32[2,2,128], index: 1, kind: input, shape index: {}]
  %s2 = inlined_call_operand.hbm [shape: f32[1,1,128], index: 2, kind: output, shape index: {}]
  %s3 = sld [smem:[#allocation0]]
  $region34: #{tpu_custom_call.1} parent=0
    _
  %s5 = ssub.s32 1, %s3
  %s6 = scalar_select 0, %s5, %s3
  $region1: #{tpu_custom_call.1} parent=0
    #allocation3 [shape = 'u8[8192]{0}', space=vmem, size = 0x2000, scoped, tag = 'input window, operand 0, single buffered']
    #allocation4 [shape = 's32[1]{0}', space=sflag, size = 0x4, scoped, tag = 'scoped memory for tpu_custom_call.1']
    #allocation5 [shape = 's32[1]{0}', space=sflag, size = 0x4, scoped, tag = 'scoped memory for tpu_custom_call.1']
    #allocation6 [shape = 'u8[2048]{0}', space=vmem, size = 0x800, scoped, tag = 'input window, operand 1, single buffered']
    #allocation7 [shape = 's32[1]{0}', space=sflag, size = 0x4, scoped, tag = 'scoped memory for tpu_custom_call.1']
    #allocation8 [shape = 'u8[512]{0}', space=vmem, size = 0x400, scoped, tag = 'output window, operand 0, single buffered']
    %7 = vsyncpa [#allocation4], 0
    %8 = vsyncpa [#allocation7], 0
    %9 = vsyncpa [#allocation5], 0
    // Predicated region
    $region2: #{tpu_custom_call.1} parent=1 // pred_check
      _
    $region3: #{tpu_custom_call.1} parent=1 // pred_check_branch
      %11 = sbr.rel (0) target = $region5
    $region4: #{tpu_custom_call.1} parent=1 // pred_region
      %s12 = sadd.s32 0, 0
      %s14 = ssub.s32 256, 256
      %15 = vsyncadd [#allocation4], %s14
      %s16 = smul.addr %s12, 32
      %s17 = scalar_lea.hbm %s0, %s16
      %s18 = sshll.u32 [#allocation3], 4
      %s19 = int_to_ptr.vmem [resolvable:$true] %s18
      %24 = dma.hbm_to_vmem [thread:$0]  %s17, 256, %s19, [#allocation4], 32, 32, 2
    $region5: #{tpu_custom_call.1} parent=1 // pred_fallthru
      _
    // Predicated region
    $region6: #{tpu_custom_call.1} parent=1 // pred_check
      _
    $region7: #{tpu_custom_call.1} parent=1 // pred_check_branch
      %26 = sbr.rel (0) target = $region9
    $region8: #{tpu_custom_call.1} parent=1 // pred_region
      %s27 = sadd.s32 0, 0
      %s29 = ssub.s32 64, 64
      %30 = vsyncadd [#allocation7], %s29
      %s31 = smul.addr %s27, 32
      %s32 = scalar_lea.hbm %s1, %s31
      %s33 = sshll.u32 [#allocation6], 4
      %s34 = int_to_ptr.vmem [resolvable:$true] %s33
      %39 = dma.hbm_to_vmem [thread:$0]  %s32, 64, %s34, [#allocation7], 32, 32, 2
    $region9: #{tpu_custom_call.1} parent=1 // pred_fallthru
      _
    // Predicated region
    $region10: #{tpu_custom_call.1} parent=1 // pred_check
      _
    $region11: #{tpu_custom_call.1} parent=1 // pred_check_branch
      %41 = sbr.rel (0) target = $region13
    $region12: #{tpu_custom_call.1} parent=1 // pred_region
      %42 = dma.done [#allocation4], 256
    $region13: #{tpu_custom_call.1} parent=1 // pred_fallthru
      _
    // Predicated region
    $region14: #{tpu_custom_call.1} parent=1 // pred_check
      _
    $region15: #{tpu_custom_call.1} parent=1 // pred_check_branch
      %44 = sbr.rel (0) target = $region17
    $region16: #{tpu_custom_call.1} parent=1 // pred_region
      %45 = dma.done [#allocation7], 64
    $region17: #{tpu_custom_call.1} parent=1 // pred_fallthru
      _
    %s46 = sadd.s32 0, 0
    %s47 = sadd.s32 0, 0
    %p48 = scmp.eq.s32.totalorder 0, 0
    // Predicated region
    $region18: #{tpu_custom_call.1} parent=1 // pred_check
      %p49 = pneg %p48
    $region19: #{tpu_custom_call.1} parent=1 // pred_check_branch
      %51 = sbr.rel (%p49) target = $region21
    $region20: #{tpu_custom_call.1} parent=1 // pred_region
      %52 = vst [vmem:[#allocation2] sm:$0x3] 0.0
    $region21: #{tpu_custom_call.1} parent=1 // pred_fallthru
      _
    %v53 = vld [vmem:[#allocation6] sm:$0x3]
    %v54 = vld [vmem:[#allocation6 + $0x2] sm:$0x3]
    %v55 = vld [vmem:[#allocation3] sm:$0x3]
    %v56 = vld [vmem:[#allocation3 + $0x2] sm:$0x3]
    %v57 = vld [vmem:[#allocation3 + $0x4] sm:$0x3]
    %v58 = vld [vmem:[#allocation3 + $0x6] sm:$0x3]
    %v59 = vld [vmem:[#allocation3 + $0x8] sm:$0x3]
    %v60 = vld [vmem:[#allocation3 + $0xa] sm:$0x3]
    %v61 = vld [vmem:[#allocation3 + $0xc] sm:$0x3]
    %v62 = vld [vmem:[#allocation3 + $0xe] sm:$0x3]
    %vm63 = vcmask 1041408
    %v64 = vsel %vm63, %v55, -inf
    %v65 = vsel %vm63, %v56, -inf
    %v66 = vsel %vm63, %v57, -inf
    %v67 = vmax.f32 %v64, %v66
    %v68 = vsel %vm63, %v58, -inf
    %v69 = vmax.f32 %v65, %v68
    %v70 = vmax.f32 %v67, %v69
    %v71 = vsel %vm63, %v59, -inf
    %v72 = vsel %vm63, %v60, -inf
    %v73 = vsel %vm63, %v61, -inf
    %v74 = vmax.f32 %v71, %v73
    %v75 = vsel %vm63, %v62, -inf
    %v76 = vmax.f32 %v72, %v75
    %v77 = vmax.f32 %v74, %v76
    %v78 = vsub.f32 %v55, %v70
    %v79 = vsub.f32 %v56, %v70
    %v80 = vsub.f32 %v57, %v70
    %v81 = vsub.f32 %v58, %v70
    %v82 = vsub.f32 %v59, %v77
    %v83 = vsub.f32 %v60, %v77
    %v84 = vsub.f32 %v61, %v77
    %v85 = vsub.f32 %v62, %v77
    %v86 = vmul.f32 %v78, 1.442695
    %v87 = vpow.pop %v86
    %v88 = vmul.f32 %v79, 1.442695
    %v89 = vpow.pop %v88
    %v90 = vmul.f32 %v80, 1.442695
    %v91 = vpow.pop %v90
    %v92 = vmul.f32 %v81, 1.442695
    %v93 = vpow.pop %v92
    %v94 = vmul.f32 %v82, 1.442695
    %v95 = vpow.pop %v94
    %v96 = vmul.f32 %v83, 1.442695
    %v97 = vpow.pop %v96
    %v98 = vmul.f32 %v84, 1.442695
    %v99 = vpow.pop %v98
    %v100 = vmul.f32 %v85, 1.442695
    %v101 = vpow.pop %v100
    %v102 = vsel %vm63, %v87, 0.0
    %v103 = vsel %vm63, %v89, 0.0
    %v104 = vadd.f32 %v102, %v103
    %v105 = vsel %vm63, %v91, 0.0
    %v106 = vadd.f32 %v104, %v105
    %v107 = vsel %vm63, %v93, 0.0
    %v108 = vadd.f32 %v106, %v107
    %v109 = vsel %vm63, %v95, 0.0
    %v110 = vsel %vm63, %v97, 0.0
    %v111 = vadd.f32 %v109, %v110
    %v112 = vsel %vm63, %v99, 0.0
    %v113 = vadd.f32 %v111, %v112
    %v114 = vsel %vm63, %v101, 0.0
    %v115 = vadd.f32 %v113, %v114
    %v116 = vrcp.pop %v108
    %v117 = vmul.f32 1.0, %v116
    %v118 = vrcp.pop %v115
    %v119 = vmul.f32 1.0, %v118
    %v120 = vmul.f32 %v87, %v117
    %v121 = vmul.f32 %v95, %v119
    %vm122 = vcmp.eq.f32.partialorder %v53, 0.0
    %vm123 = vcmp.eq.f32.partialorder %v54, 0.0
    %v124 = vsel %vm122, 1, 0
    %v125 = vsel %vm123, 1, 0
    %v126 = vcvt.s32.f32 %v124
    %v127 = vcvt.s32.f32 %v125
    %v128 = vmul.f32 %v120, 1.442695
    %v129 = vpow.pop %v128
    %v130 = vmul.f32 %v121, 1.442695
    %v131 = vpow.pop %v130
    %v132 = vsel %vm63, %v129, 0.0
    %v133 = vsel %vm63, %v131, 0.0
    %v134 = vadd.f32 %v132, %v133
    %v135 = vsub.f32 %v120, %v126
    %v136 = vsub.f32 %v121, %v127
    %v137 = vmul.f32 %v129, %v135
    %v138 = vmul.f32 %v131, %v136
    %v139 = vsel %vm63, %v137, 0.0
    %v140 = vsel %vm63, %v138, 0.0
    %v141 = vadd.f32 %v139, %v140
    %v142 = vrcp.pop %v134
    %v143 = vmul.f32 1.0, %v142
    %v144 = vmul.f32 %v141, %v143
    %v145 = vsel %vm63, %v126, 0.0
    %v146 = vsel %vm63, %v127, 0.0
    %v147 = vadd.f32 %v145, %v146
    %vm148 = vcmp.gt.f32.partialorder %v147, 0.5
    %v149 = vsel %vm148, 1.3132616, 0.6931472
    %vm150 = vcmp.gt.f32.partialorder %v147, 1.5
    %v151 = vsel %vm150, 1.6931472, %v149
    %v152 = vlog2.pop %v134
    %v153 = vmul.f32 %v152, 0.6931472
    %v154 = vsub.f32 %v144, %v153
    %v155 = vadd.f32 %v154, %v151
    %v156 = vadd.f32 %v155, 0.0
    %v157 = vmul.f32 %v89, %v117
    %v158 = vmul.f32 %v97, %v119
    %vm159 = vcmp.eq.f32.partialorder %v53, 1.0
    %vm160 = vcmp.eq.f32.partialorder %v54, 1.0
    %v161 = vsel %vm159, 1, 0
    %v162 = vsel %vm160, 1, 0
    %v163 = vcvt.s32.f32 %v161
    %v164 = vcvt.s32.f32 %v162
    %v165 = vmul.f32 %v157, 1.442695
    %v166 = vpow.pop %v165
    %v167 = vmul.f32 %v158, 1.442695
    %v168 = vpow.pop %v167
    %v169 = vsel %vm63, %v166, 0.0
    %v170 = vsel %vm63, %v168, 0.0
    %v171 = vadd.f32 %v169, %v170
    %v172 = vsub.f32 %v157, %v163
    %v173 = vsub.f32 %v158, %v164
    %v174 = vmul.f32 %v166, %v172
    %v175 = vmul.f32 %v168, %v173
    %v176 = vsel %vm63, %v174, 0.0
    %v177 = vsel %vm63, %v175, 0.0
    %v178 = vadd.f32 %v176, %v177
    %v179 = vrcp.pop %v171
    %v180 = vmul.f32 1.0, %v179
    %v181 = vmul.f32 %v178, %v180
    %v182 = vsel %vm63, %v163, 0.0
    %v183 = vsel %vm63, %v164, 0.0
    %v184 = vadd.f32 %v182, %v183
    %vm185 = vcmp.gt.f32.partialorder %v184, 0.5
    %v186 = vsel %vm185, 1.3132616, 0.6931472
    %vm187 = vcmp.gt.f32.partialorder %v184, 1.5
    %v188 = vsel %vm187, 1.6931472, %v186
    %v189 = vlog2.pop %v171
    %v190 = vmul.f32 %v189, 0.6931472
    %v191 = vsub.f32 %v181, %v190
    %v192 = vadd.f32 %v191, %v188
    %v193 = vadd.f32 %v156, %v192
    %v194 = vmul.f32 %v91, %v117
    %v195 = vmul.f32 %v99, %v119
    %vm196 = vcmp.eq.f32.partialorder %v53, 2.0
    %vm197 = vcmp.eq.f32.partialorder %v54, 2.0
    %v198 = vsel %vm196, 1, 0
    %v199 = vsel %vm197, 1, 0
    %v200 = vcvt.s32.f32 %v198
    %v201 = vcvt.s32.f32 %v199
    %v202 = vmul.f32 %v194, 1.442695
    %v203 = vpow.pop %v202
    %v204 = vmul.f32 %v195, 1.442695
    %v205 = vpow.pop %v204
    %v206 = vsel %vm63, %v203, 0.0
    %v207 = vsel %vm63, %v205, 0.0
    %v208 = vadd.f32 %v206, %v207
    %v209 = vsub.f32 %v194, %v200
    %v210 = vsub.f32 %v195, %v201
    %v211 = vmul.f32 %v203, %v209
    %v212 = vmul.f32 %v205, %v210
    %v213 = vsel %vm63, %v211, 0.0
    %v214 = vsel %vm63, %v212, 0.0
    %v215 = vadd.f32 %v213, %v214
    %v216 = vrcp.pop %v208
    %v217 = vmul.f32 1.0, %v216
    %v218 = vmul.f32 %v215, %v217
    %v219 = vsel %vm63, %v200, 0.0
    %v220 = vsel %vm63, %v201, 0.0
    %v221 = vadd.f32 %v219, %v220
    %vm222 = vcmp.gt.f32.partialorder %v221, 0.5
    %v223 = vsel %vm222, 1.3132616, 0.6931472
    %vm224 = vcmp.gt.f32.partialorder %v221, 1.5
    %v225 = vsel %vm224, 1.6931472, %v223
    %v226 = vlog2.pop %v208
    %v227 = vmul.f32 %v226, 0.6931472
    %v228 = vsub.f32 %v218, %v227
    %v229 = vadd.f32 %v228, %v225
    %v230 = vadd.f32 %v193, %v229
    %v231 = vmul.f32 %v93, %v117
    %v232 = vmul.f32 %v101, %v119
    %vm233 = vcmp.eq.f32.partialorder %v53, 3.0
    %vm234 = vcmp.eq.f32.partialorder %v54, 3.0
    %v235 = vsel %vm233, 1, 0
    %v236 = vsel %vm234, 1, 0
    %v237 = vcvt.s32.f32 %v235
    %v238 = vcvt.s32.f32 %v236
    %v239 = vmul.f32 %v231, 1.442695
    %v240 = vpow.pop %v239
    %v241 = vmul.f32 %v232, 1.442695
    %v242 = vpow.pop %v241
    %v243 = vsel %vm63, %v240, 0.0
    %v244 = vsel %vm63, %v242, 0.0
    %v245 = vadd.f32 %v243, %v244
    %v246 = vsub.f32 %v231, %v237
    %v247 = vsub.f32 %v232, %v238
    %v248 = vmul.f32 %v240, %v246
    %v249 = vmul.f32 %v242, %v247
    %v250 = vsel %vm63, %v248, 0.0
    %v251 = vsel %vm63, %v249, 0.0
    %v252 = vadd.f32 %v250, %v251
    %v253 = vrcp.pop %v245
    %v254 = vmul.f32 1.0, %v253
    %v255 = vmul.f32 %v252, %v254
    %v256 = vsel %vm63, %v237, 0.0
    %v257 = vsel %vm63, %v238, 0.0
    %v258 = vadd.f32 %v256, %v257
    %vm259 = vcmp.gt.f32.partialorder %v258, 0.5
    %v260 = vsel %vm259, 1.3132616, 0.6931472
    %vm261 = vcmp.gt.f32.partialorder %v258, 1.5
    %v262 = vsel %vm261, 1.6931472, %v260
    %v263 = vlog2.pop %v245
    %v264 = vmul.f32 %v263, 0.6931472
    %v265 = vsub.f32 %v255, %v264
    %v266 = vadd.f32 %v265, %v262
    %v267 = vadd.f32 %v230, %v266
    %v268 = vld [vmem:[#allocation2] sm:$0x3]
    %v269 = vadd.f32 %v268, %v267
    %270 = vst [vmem:[#allocation2] sm:$0x3] %v269
    // Predicated region
    $region22: #{tpu_custom_call.1} parent=1 // pred_check
      %p271 = pneg %p48
    $region23: #{tpu_custom_call.1} parent=1 // pred_check_branch
      %273 = sbr.rel (%p271) target = $region25
    $region24: #{tpu_custom_call.1} parent=1 // pred_region
      %v274 = vld [vmem:[#allocation2] sm:$0x3]
      %v275 = vsel %vm63, %v274, 0.0
      %v276 = vrot.slane %v275, 4
      %v277 = vadd.f32 %v275, %v276
      %v278 = vrot.slane %v277, 2
      %v279 = vadd.f32 %v277, %v278
      %v280 = vrot.slane %v279, 1
      %v281 = vadd.f32 %v279, %v280
      %v282 = vmul.f32 %v281, 0.00048828125
      %283 = vst [vmem:[#allocation8] sm:$0x1] %v282
    $region25: #{tpu_custom_call.1} parent=1 // pred_fallthru
      _
    // Predicated region
    $region26: #{tpu_custom_call.1} parent=1 // pred_check
      _
    $region27: #{tpu_custom_call.1} parent=1 // pred_check_branch
      %285 = sbr.rel (0) target = $region29
    $region28: #{tpu_custom_call.1} parent=1 // pred_region
      %s287 = ssub.s32 16, 16
      %288 = vsyncadd [#allocation5], %s287
      %s290 = sshll.u32 [#allocation8], 4
      %s291 = int_to_ptr.vmem [resolvable:$true] %s290
      %293 = dma.vmem_to_hbm [thread:$0]  %s291, 16, %s2, [#allocation5]
    $region29: #{tpu_custom_call.1} parent=1 // pred_fallthru
      _
    // Predicated region
    $region30: #{tpu_custom_call.1} parent=1 // pred_check
      _
    $region31: #{tpu_custom_call.1} parent=1 // pred_check_branch
      %295 = sbr.rel (0) target = $region33
    $region32: #{tpu_custom_call.1} parent=1 // pred_region
      %296 = dma.done [#allocation5], 16
    $region33: #{tpu_custom_call.1} parent=1 // pred_fallthru
      _
    %297 = vsyncpa [#allocation4], 1
    %298 = vsyncpa [#allocation7], 1
    %299 = vsyncpa [#allocation5], 1

</llo_original>
